<compile_context>
chip_gen: v7x
topology: tpu7x:2x2x1
jax: 0.10.0
libtpu: 0.0.40
codegen_flags: <defaults>
</compile_context>

<pallas_src>
import jax
import jax.numpy as jnp
from jax.experimental import pallas as pl
from jax.experimental.pallas import tpu as pltpu


# ----------------------------- kernels -------------------------------------


def ffn_kernel_single(x_ref, w1_ref, b1_ref, w2_ref, b2_ref, o_ref):
    """Whole d_ff resident: one pass, no accumulator scratch."""
    h = jnp.dot(x_ref[...], w1_ref[...], preferred_element_type=jnp.float32)
    h = jnp.maximum(h + b1_ref[...], 0.0)
    y = jnp.dot(h.astype(w2_ref.dtype), w2_ref[...],
                preferred_element_type=jnp.float32)
    o_ref[...] = (y + b2_ref[...]).astype(o_ref.dtype)


def ffn_kernel_chunked(x_ref, w1_ref, b1_ref, w2_ref, b2_ref, o_ref, acc_ref):
    """d_ff streamed in chunks along grid axis 1; f32 accumulator in VMEM."""
    k = pl.program_id(1)

    @pl.when(k == 0)
    def _init():
        acc_ref[...] = jnp.zeros_like(acc_ref)

    h = jnp.dot(x_ref[...], w1_ref[...], preferred_element_type=jnp.float32)
    h = jnp.maximum(h + b1_ref[...], 0.0)
    acc_ref[...] += jnp.dot(h.astype(w2_ref.dtype), w2_ref[...],
                            preferred_element_type=jnp.float32)

    @pl.when(k == pl.num_programs(1) - 1)
    def _finalize():
        o_ref[...] = (acc_ref[...] + b2_ref[...]).astype(o_ref.dtype)


# ----------------------------- helpers --------------------------------------


def _round_up(x, m):
    return ((x + m - 1) // m) * m


def _vmem_budget_bytes():
    """~80% of physical VMEM (leaves headroom for Mosaic internal scratch)."""
    phys = 64 * 1024 * 1024  # conservative fallback (v7x per-TC size)
    try:
        info = pltpu.get_tpu_info()
        phys = int(getattr(info, "vmem_capacity_bytes", phys))
    except Exception:
        pass
    return int(phys * 0.8)


def _vmem_footprint(tile_rows, ff_chunk, n_ff, d_model, in_itemsize,
                    w_itemsize, out_itemsize):
    """Approximate double-buffered per-step VMEM footprint in bytes."""
    x_bufs = 2 * tile_rows * d_model * in_itemsize
    o_bufs = 2 * tile_rows * d_model * out_itemsize
    w_bufs = 2 * 2 * d_model * ff_chunk * w_itemsize          # W1 + W2
    b_bufs = 2 * (ff_chunk + d_model) * 4                     # f32 biases
    acc = tile_rows * d_model * 4 if n_ff > 1 else 0
    return x_bufs + o_bufs + w_bufs + b_bufs + acc


# ----------------------------- wrapper --------------------------------------


def positionwise_ffn(x, w1, b1, w2, b2, *, tile_rows=None, max_ff_chunk=2048,
                     compute_dtype=None, weights_resident=None):
    """y = relu(x @ W1 + b1) @ W2 + b2, position-wise over (batch, seq, d_model).

    Weights are stored transposed relative to torch.nn.Linear:
      W1: (d_model, d_ff), W2: (d_ff, d_model).
    Dropout from the PyTorch module is identity (eval mode).
    """
    batch, seq, d_model = x.shape
    d_ff = w1.shape[1]
    assert w1.shape == (d_model, d_ff)
    assert w2.shape == (d_ff, d_model)
    assert b1.shape == (d_ff,)
    assert b2.shape == (d_model,)

    out_dtype = x.dtype
    if compute_dtype is not None:
        x = x.astype(compute_dtype)
        w1 = w1.astype(compute_dtype)
        w2 = w2.astype(compute_dtype)
    in_itemsize = jnp.dtype(x.dtype).itemsize
    w_itemsize = jnp.dtype(w1.dtype).itemsize
    out_itemsize = jnp.dtype(out_dtype).itemsize

    budget = _vmem_budget_bytes()

    # --- row tiling ---------------------------------------------------------
    ROW_ALIGN = 256       # MXU-friendly on v6e/v7x (multiple of 128 for v5e)
    MIN_ROW_ALIGN = 16    # bf16 sublane-packing safe minimum
    n_rows = batch * seq

    if tile_rows is None:
        tile_rows = 512
    tile_rows = max(MIN_ROW_ALIGN, int(tile_rows))

    if n_rows >= 2 * ROW_ALIGN:
        tile_rows = _round_up(tile_rows, ROW_ALIGN)
        # Keep at least 2 row tiles so the "parallel" axis can shard across
        # both TensorCores on v7x.
        half = _round_up((n_rows + 1) // 2, ROW_ALIGN)
        tile_rows = min(tile_rows, half)
    else:
        # Tiny / toy row counts: a single tile holding all rows.
        tile_rows = min(tile_rows, _round_up(n_rows, MIN_ROW_ALIGN))
        tile_rows = _round_up(tile_rows, MIN_ROW_ALIGN)

    def fp(tr, fc, nff):
        return _vmem_footprint(tr, fc, nff, d_model, in_itemsize, w_itemsize,
                               out_itemsize)

    # --- d_ff handling: fully resident weights vs streamed chunks ------------
    if weights_resident is None:
        weights_resident = fp(tile_rows, d_ff, 1) <= budget

    if weights_resident:
        ff_chunk, d_ff_pad, n_ff = d_ff, d_ff, 1
        while fp(tile_rows, ff_chunk, n_ff) > budget and tile_rows > ROW_ALIGN:
            tile_rows = _round_up(tile_rows // 2, ROW_ALIGN)
    else:
        FF_ALIGN = 256
        ff_chunk = max(FF_ALIGN, (max_ff_chunk // FF_ALIGN) * FF_ALIGN)
        ff_chunk = min(ff_chunk, _round_up(d_ff, FF_ALIGN))
        while fp(tile_rows, ff_chunk, 2) > budget and ff_chunk > FF_ALIGN:
            ff_chunk -= FF_ALIGN
        while fp(tile_rows, ff_chunk, 2) > budget and tile_rows > ROW_ALIGN:
            tile_rows = _round_up(tile_rows // 2, ROW_ALIGN)
        d_ff_pad = _round_up(d_ff, ff_chunk)
        n_ff = d_ff_pad // ff_chunk

    # Zero-pad d_ff if necessary (padded hidden units contribute exactly 0:
    # relu(x @ 0 + 0) = 0, and 0 @ W2_pad rows = 0).
    if d_ff_pad != d_ff:
        w1 = jnp.pad(w1, ((0, 0), (0, d_ff_pad - d_ff)))
        w2 = jnp.pad(w2, ((0, d_ff_pad - d_ff), (0, 0)))
        b1 = jnp.pad(b1, (0, d_ff_pad - d_ff))

    # --- row padding ----------------------------------------------------------
    n_rows_pad = _round_up(n_rows, tile_rows)
    x2 = x.reshape(n_rows, d_model)
    if n_rows_pad != n_rows:
        x2 = jnp.pad(x2, ((0, n_rows_pad - n_rows), (0, 0)))
    n_row_tiles = n_rows_pad // tile_rows

    # Biases stay f32 (added on the f32 accumulation path).
    b1_2 = b1.reshape(1, d_ff_pad).astype(jnp.float32)
    b2_2 = b2.reshape(1, d_model).astype(jnp.float32)

    # --- cost estimate (counts real streamed weight traffic) ------------------
    weight_bytes = (w1.size + w2.size) * w_itemsize
    weight_stream = n_row_tiles if n_ff > 1 else 1
    flops = 4 * n_rows_pad * d_model * d_ff_pad
    bytes_accessed = int(
        x2.size * in_itemsize
        + weight_stream * weight_bytes
        + b1_2.size * 4 + b2_2.size * 4
        + n_rows_pad * d_model * out_itemsize)
    cost = pl.CostEstimate(flops=flops, transcendentals=0,
                           bytes_accessed=bytes_accessed)

    vmem_limit = budget  # ~51 MiB on v7x, ~102 MiB on v5e/v6e

    if n_ff == 1:
        grid = (n_row_tiles,)
        grid_spec = pltpu.PrefetchScalarGridSpec(
            num_scalar_prefetch=0,
            grid=grid,
            in_specs=[
                pl.BlockSpec((tile_rows, d_model), lambda i: (i, 0)),   # x rows
                pl.BlockSpec((d_model, d_ff_pad), lambda i: (0, 0)),    # W1 (resident)
                pl.BlockSpec((1, d_ff_pad), lambda i: (0, 0)),          # b1
                pl.BlockSpec((d_ff_pad, d_model), lambda i: (0, 0)),    # W2 (resident)
                pl.BlockSpec((1, d_model), lambda i: (0, 0)),           # b2
            ],
            out_specs=pl.BlockSpec((tile_rows, d_model), lambda i: (i, 0)),
            scratch_shapes=[],
        )
        kernel = ffn_kernel_single
        dim_sem = ("parallel",)
    else:
        grid = (n_row_tiles, n_ff)
        grid_spec = pltpu.PrefetchScalarGridSpec(
            num_scalar_prefetch=0,
            grid=grid,
            in_specs=[
                pl.BlockSpec((tile_rows, d_model), lambda i, k: (i, 0)),  # x rows
                pl.BlockSpec((d_model, ff_chunk), lambda i, k: (0, k)),   # W1 chunk
                pl.BlockSpec((1, ff_chunk), lambda i, k: (0, k)),         # b1 chunk
                pl.BlockSpec((ff_chunk, d_model), lambda i, k: (k, 0)),   # W2 chunk
                pl.BlockSpec((1, d_model), lambda i, k: (0, 0)),          # b2
            ],
            out_specs=pl.BlockSpec((tile_rows, d_model), lambda i, k: (i, 0)),
            scratch_shapes=[pltpu.VMEM((tile_rows, d_model), jnp.float32)],
        )
        kernel = ffn_kernel_chunked
        dim_sem = ("parallel", "arbitrary")

    out = pl.pallas_call(
        kernel,
        out_shape=jax.ShapeDtypeStruct((n_rows_pad, d_model), out_dtype),
        grid_spec=grid_spec,
        compiler_params=pltpu.CompilerParams(
            dimension_semantics=dim_sem,
            vmem_limit_bytes=vmem_limit,
        ),
        cost_estimate=cost,
    )(x2, w1, b1_2, w2, b2_2)

    out = out[:n_rows]
    return out.reshape(batch, seq, d_model)


# ----------------------------- demo / checks --------------------------------


if __name__ == "__main__":
    # Small, module-consistent shapes: batch=2, seq=8, d_model=32, d_ff=64.
    batch, seq, d_model, d_ff = 2, 8, 32, 64

    key = jax.random.PRNGKey(0)
    kx, k1, k2, k3, k4 = jax.random.split(key, 5)

    x = jax.random.normal(kx, (batch, seq, d_model), dtype=jnp.float32)
    # Deterministic parameter init (mimic nn.Linear uniform bounds).
    bound1 = 1.0 / (d_model ** 0.5)
    bound2 = 1.0 / (d_ff ** 0.5)
    w1 = jax.random.uniform(k1, (d_model, d_ff), jnp.float32, -bound1, bound1)
    b1 = jax.random.uniform(k2, (d_ff,), jnp.float32, -bound1, bound1)
    w2 = jax.random.uniform(k3, (d_ff, d_model), jnp.float32, -bound2, bound2)
    b2 = jax.random.uniform(k4, (d_model,), jnp.float32, -bound2, bound2)

    ref = jnp.maximum(x @ w1 + b1, 0.0) @ w2 + b2

    # 1) f32 path, resident weights, single-pass kernel (dropout = identity).
    y = jax.block_until_ready(positionwise_ffn(x, w1, b1, w2, b2))
    assert y.shape == (batch, seq, d_model)
    assert jnp.allclose(y, ref, atol=1e-5, rtol=1e-5)

    # 2) bf16 matmul inputs with f32 accumulation (loose check).
    y_bf16 = jax.block_until_ready(
        positionwise_ffn(x, w1, b1, w2, b2, compute_dtype=jnp.bfloat16))
    assert y_bf16.dtype == jnp.float32
    assert jnp.allclose(y_bf16, ref, atol=1e-1, rtol=1e-1)

    # 3) Chunked-accumulator path with d_ff padding (384 -> 2x256), row padding
    #    (768 rows -> 2 tiles of 512), forced weight streaming.
    d_model2, d_ff2, seq2 = 128, 384, 384
    kx2, k5, k6, k7, k8 = jax.random.split(jax.random.PRNGKey(1), 5)
    x_b = jax.random.normal(kx2, (batch, seq2, d_model2), dtype=jnp.float32)
    w1b = jax.random.uniform(k5, (d_model2, d_ff2), jnp.float32, -0.05, 0.05)
    b1b = jax.random.uniform(k6, (d_ff2,), jnp.float32, -0.05, 0.05)
    w2b = jax.random.uniform(k7, (d_ff2, d_model2), jnp.float32, -0.05, 0.05)
    b2b = jax.random.uniform(k8, (d_model2,), jnp.float32, -0.05, 0.05)
    ref2 = jnp.maximum(x_b @ w1b + b1b, 0.0) @ w2b + b2b
    y2 = jax.block_until_ready(
        positionwise_ffn(x_b, w1b, b1b, w2b, b2b,
                         max_ff_chunk=256, weights_resident=False))
    assert y2.shape == (batch, seq2, d_model2)
    assert jnp.allclose(y2, ref2, atol=1e-4, rtol=1e-4)

    print("KERNEL_OK")
</pallas_src>

<mosaic_0001>
module attributes {stable_mosaic.version = 11 : i64} {
  func.func @ffn_kernel_single(%arg0: i32, %arg1: memref<16x32xf32, #tpu.memory_space<vmem>>, %arg2: memref<32x64xf32, #tpu.memory_space<vmem>>, %arg3: memref<1x64xf32, #tpu.memory_space<vmem>>, %arg4: memref<64x32xf32, #tpu.memory_space<vmem>>, %arg5: memref<1x32xf32, #tpu.memory_space<vmem>>, %arg6: memref<16x32xf32, #tpu.memory_space<vmem>>) attributes {dimension_semantics = [#tpu.dimension_semantics<parallel>], iteration_bounds = array<i64: 1>, scalar_prefetch = 0 : i64, scratch_operands = 0 : i64, tpu.core_type = #tpu.core_type<tc>, window_params = [{transform_indices = @transform_0, window_bounds = array<i64: 16, 32>}, {pipeline_mode = #tpu.pipeline_mode<synchronous>, transform_indices = @transform_1, window_bounds = array<i64: 32, 64>}, {pipeline_mode = #tpu.pipeline_mode<synchronous>, transform_indices = @transform_2, window_bounds = array<i64: 1, 64>}, {pipeline_mode = #tpu.pipeline_mode<synchronous>, transform_indices = @transform_3, window_bounds = array<i64: 64, 32>}, {pipeline_mode = #tpu.pipeline_mode<synchronous>, transform_indices = @transform_4, window_bounds = array<i64: 1, 32>}, {transform_indices = @transform_5, window_bounds = array<i64: 16, 32>}]} {
    %c0 = arith.constant 0 : index
    %c0_0 = arith.constant 0 : index
    %0 = vector.load %arg1[%c0, %c0_0] : memref<16x32xf32, #tpu.memory_space<vmem>>, vector<16x32xf32>
    %c0_1 = arith.constant 0 : index
    %c0_2 = arith.constant 0 : index
    %1 = vector.load %arg2[%c0_1, %c0_2] : memref<32x64xf32, #tpu.memory_space<vmem>>, vector<32x64xf32>
    %cst = arith.constant dense<0.000000e+00> : vector<16x64xf32>
    %2 = tpu.matmul %0, %1, %cst {dimension_numbers = #tpu.dot_dimension_numbers<[1], [0], [0], [1], [0, 0, 1, 1], [], []>} : vector<16x32xf32>, vector<32x64xf32>, vector<16x64xf32> -> vector<16x64xf32>
    %c0_3 = arith.constant 0 : index
    %c0_4 = arith.constant 0 : index
    %3 = vector.load %arg3[%c0_3, %c0_4] : memref<1x64xf32, #tpu.memory_space<vmem>>, vector<1x64xf32>
    %4 = vector.broadcast %3 : vector<1x64xf32> to vector<16x64xf32>
    %5 = arith.addf %2, %4 : vector<16x64xf32>
    %cst_5 = arith.constant 0.000000e+00 : f32
    %6 = vector.broadcast %cst_5 : f32 to vector<16x64xf32>
    %7 = arith.maximumf %5, %6 : vector<16x64xf32>
    %c0_6 = arith.constant 0 : index
    %c0_7 = arith.constant 0 : index
    %8 = vector.load %arg4[%c0_6, %c0_7] : memref<64x32xf32, #tpu.memory_space<vmem>>, vector<64x32xf32>
    %cst_8 = arith.constant dense<0.000000e+00> : vector<16x32xf32>
    %9 = tpu.matmul %7, %8, %cst_8 {dimension_numbers = #tpu.dot_dimension_numbers<[1], [0], [0], [1], [0, 0, 1, 1], [], []>} : vector<16x64xf32>, vector<64x32xf32>, vector<16x32xf32> -> vector<16x32xf32>
    %c0_9 = arith.constant 0 : index
    %c0_10 = arith.constant 0 : index
    %10 = vector.load %arg5[%c0_9, %c0_10] : memref<1x32xf32, #tpu.memory_space<vmem>>, vector<1x32xf32>
    %11 = vector.broadcast %10 : vector<1x32xf32> to vector<16x32xf32>
    %12 = arith.addf %9, %11 : vector<16x32xf32>
    %c0_11 = arith.constant 0 : index
    %c0_12 = arith.constant 0 : index
    %13 = vector.load %arg6[%c0_11, %c0_12] : memref<16x32xf32, #tpu.memory_space<vmem>>, vector<16x32xf32>
    tpu.vector_store %arg6[%c0_11, %c0_12], %12 {strides = array<i32>} : memref<16x32xf32, #tpu.memory_space<vmem>>, vector<16x32xf32>,
    return
  }
  func.func @transform_0(%arg0: i32) -> (i32, i32) {
    %c0_i32 = arith.constant 0 : i32
    %c0_i32_0 = arith.constant 0 : i32
    return %arg0, %c0_i32 : i32, i32
  }
  func.func @transform_1(%arg0: i32) -> (i32, i32) {
    %c0_i32 = arith.constant 0 : i32
    %c0_i32_0 = arith.constant 0 : i32
    %c0_i32_1 = arith.constant 0 : i32
    return %c0_i32, %c0_i32_0 : i32, i32
  }
  func.func @transform_2(%arg0: i32) -> (i32, i32) {
    %c0_i32 = arith.constant 0 : i32
    %c0_i32_0 = arith.constant 0 : i32
    %c0_i32_1 = arith.constant 0 : i32
    return %c0_i32, %c0_i32_0 : i32, i32
  }
  func.func @transform_3(%arg0: i32) -> (i32, i32) {
    %c0_i32 = arith.constant 0 : i32
    %c0_i32_0 = arith.constant 0 : i32
    %c0_i32_1 = arith.constant 0 : i32
    return %c0_i32, %c0_i32_0 : i32, i32
  }
  func.func @transform_4(%arg0: i32) -> (i32, i32) {
    %c0_i32 = arith.constant 0 : i32
    %c0_i32_0 = arith.constant 0 : i32
    %c0_i32_1 = arith.constant 0 : i32
    return %c0_i32, %c0_i32_0 : i32, i32
  }
  func.func @transform_5(%arg0: i32) -> (i32, i32) {
    %c0_i32 = arith.constant 0 : i32
    %c0_i32_0 = arith.constant 0 : i32
    return %arg0, %c0_i32 : i32, i32
  }
}

</mosaic_0001>

<llo_original>
// kernel: tpu_custom_call.1
$region0: #{tpu_custom_call.1}
  #allocation0 [shape = 'u32[]', space=smem, size = 0x4, offset = 0x4, fixed_abs, tag = 'smem constant byte address 0x4 - core index']
  #allocation1 [shape = 'u32[144,128]{1,0:T(1,128)}', space=vmem, size = 0x12000, scoped, tag = 'internal scratch']
  %s0 = inlined_call_operand.vmem [shape: f32[16,32], index: 0, kind: input, shape index: {}]
  %s1 = inlined_call_operand.vmem [shape: f32[32,64], index: 1, kind: input, shape index: {}]
  %s2 = inlined_call_operand.vmem [shape: f32[1,64], index: 2, kind: input, shape index: {}]
  %s3 = inlined_call_operand.vmem [shape: f32[64,32], index: 3, kind: input, shape index: {}]
  %s4 = inlined_call_operand.vmem [shape: f32[1,32], index: 4, kind: input, shape index: {}]
  %s5 = inlined_call_operand.hbm [shape: f32[16,32], index: 5, kind: output, shape index: {}]
  %s6 = sld [smem:[#allocation0]]
  $region30: #{tpu_custom_call.1} parent=0
    _
  %s8 = ssub.s32 1, %s6
  %s9 = scalar_select 0, %s8, %s6
  $region1: #{tpu_custom_call.1} parent=0
    #allocation2 [shape = 'u8[8192]{0}', space=vmem, size = 0x2000, scoped, tag = 'output window, operand 0, single buffered']
    #allocation3 [shape = 's32[1]{0}', space=sflag, size = 0x4, scoped, tag = 'scoped memory for tpu_custom_call.1']
    %10 = vsyncpa [#allocation3], 0
    // Predicated region
    $region2: #{tpu_custom_call.1} parent=1 // pred_check
      _
    $region3: #{tpu_custom_call.1} parent=1 // pred_check_branch
      %12 = sbr.rel (0) target = $region5
    $region4: #{tpu_custom_call.1} parent=1 // pred_region
      _
    $region5: #{tpu_custom_call.1} parent=1 // pred_fallthru
      _
    // Predicated region
    $region6: #{tpu_custom_call.1} parent=1 // pred_check
      _
    $region7: #{tpu_custom_call.1} parent=1 // pred_check_branch
      %14 = sbr.rel (0) target = $region9
    $region8: #{tpu_custom_call.1} parent=1 // pred_region
      _
    $region9: #{tpu_custom_call.1} parent=1 // pred_fallthru
      _
    // Predicated region
    $region10: #{tpu_custom_call.1} parent=1 // pred_check
      _
    $region11: #{tpu_custom_call.1} parent=1 // pred_check_branch
      %16 = sbr.rel (0) target = $region13
    $region12: #{tpu_custom_call.1} parent=1 // pred_region
      _
    $region13: #{tpu_custom_call.1} parent=1 // pred_fallthru
      _
    // Predicated region
    $region14: #{tpu_custom_call.1} parent=1 // pred_check
      _
    $region15: #{tpu_custom_call.1} parent=1 // pred_check_branch
      %18 = sbr.rel (0) target = $region17
    $region16: #{tpu_custom_call.1} parent=1 // pred_region
      _
    $region17: #{tpu_custom_call.1} parent=1 // pred_fallthru
      _
    // Predicated region
    $region18: #{tpu_custom_call.1} parent=1 // pred_check
      _
    $region19: #{tpu_custom_call.1} parent=1 // pred_check_branch
      %20 = sbr.rel (0) target = $region21
    $region20: #{tpu_custom_call.1} parent=1 // pred_region
      _
    $region21: #{tpu_custom_call.1} parent=1 // pred_fallthru
      _
    %v21 = vld [vmem:[%s0] sm:$0xff]
    %v22 = vld [vmem:[%s0 + $0x8] sm:$0xff]
    %v23 = vld [vmem:[%s1] sm:$0xff]
    %v24 = vld [vmem:[%s1 + $0x8] sm:$0xff]
    %v25 = vld [vmem:[%s1 + $0x10] sm:$0xff]
    %v26 = vld [vmem:[%s1 + $0x18] sm:$0xff]
    %v27 = vld [vmem:[%s2] sm:$0x1]
    %v29 = vlaneseq
    %v30 = vshrl.u32 %v29, 7
    %v31 = vsub.s32 0, %v30
    %v32 = vrot.slane %v27, %v31
    %vm34 = vcmask 261120
    %v36 = vsel %vm34, %v21, 0
    %v39 = vsel %vm34, %v22, 0
    %41 = vmatprep.subr.mxu0 0.0
    %42 = vmatpush1.msra.mxu0 %v23
    %43 = vmatprep.subr.mxu0 0.0
    %44 = vmatpush1.msra.mxu0 %v24
    %45 = vmatprep.subr.mxu0 0.0
    %46 = vmatpush1.msra.mxu0 %v25
    %47 = vmatprep.subr.mxu0 0.0
    %48 = vmatpush1.msra.mxu0 %v26
    %49 = vmatprep.subr.mxu0 0.0
    %50 = vmatpush1.msra.mxu0 0.0
    %51 = vmatprep.subr.mxu0 0.0
    %52 = vmatpush1.msra.mxu0 0.0
    %53 = vmatprep.subr.mxu0 0.0
    %54 = vmatpush1.msra.mxu0 0.0
    %55 = vmatprep.subr.mxu0 0.0
    %56 = vmatpush1.msra.mxu0 0.0
    %57 = vmatprep.subr.mxu0 0.0
    %58 = vmatpush1.msra.mxu0 0.0
    %59 = vmatprep.subr.mxu0 0.0
    %60 = vmatpush1.msra.mxu0 0.0
    %61 = vmatprep.subr.mxu0 0.0
    %62 = vmatpush1.msra.mxu0 0.0
    %63 = vmatprep.subr.mxu0 0.0
    %64 = vmatpush1.msra.mxu0 0.0
    %65 = vmatprep.subr.mxu0 0.0
    %66 = vmatpush1.msra.mxu0 0.0
    %67 = vmatprep.subr.mxu0 0.0
    %68 = vmatpush1.msra.mxu0 0.0
    %69 = vmatprep.subr.mxu0 0.0
    %70 = vmatpush1.msra.mxu0 0.0
    %71 = vmatprep.subr.mxu0 0.0
    %72 = vmatpush1.msra.mxu0 0.0
    %73 = vmatprep.subr.mxu0 0.0
    %74 = vmatpush1.msra.mxu0 0.0
    %75 = vmatprep.subr.mxu0 0.0
    %76 = vmatpush1.msra.mxu0 0.0
    %77 = vmatprep.subr.mxu0 0.0
    %78 = vmatpush1.msra.mxu0 0.0
    %79 = vmatprep.subr.mxu0 0.0
    %80 = vmatpush1.msra.mxu0 0.0
    %81 = vmatprep.subr.mxu0 0.0
    %82 = vmatpush1.msra.mxu0 0.0
    %83 = vmatprep.subr.mxu0 0.0
    %84 = vmatpush1.msra.mxu0 0.0
    %85 = vmatprep.subr.mxu0 0.0
    %86 = vmatpush1.msra.mxu0 0.0
    %87 = vmatprep.subr.mxu0 0.0
    %88 = vmatpush1.msra.mxu0 0.0
    %89 = vmatprep.subr.mxu0 0.0
    %90 = vmatpush1.msra.mxu0 0.0
    %91 = vmatprep.subr.mxu0 0.0
    %92 = vmatpush1.msra.mxu0 0.0
    %93 = vmatprep.subr.mxu0 0.0
    %94 = vmatpush1.msra.mxu0 0.0
    %95 = vmatprep.subr.mxu0 0.0
    %96 = vmatpush1.msra.mxu0 0.0
    %97 = vmatprep.subr.mxu0 0.0
    %98 = vmatpush1.msra.mxu0 0.0
    %99 = vmatprep.subr.mxu0 0.0
    %100 = vmatpush1.msra.mxu0 0.0
    %101 = vmatprep.subr.mxu0 0.0
    %102 = vmatpush1.msra.mxu0 0.0
    %103 = vmatprep.subr.mxu0 0.0
    %104 = vmatpush1.msra.mxu0 0.0
    %105 = vmatprep.mubr.f32.mxu0 0.0
    %106 = vmatmul.mubr.f32.gmra.mrb[0].mxu0 %v36
    %v107 = vpop.f32.mrb[0].mxu0
    %v108 = vadd.f32 %v32, %v107
    %v109 = vpop.f32.mrb[0].mxu0
    %110 = vmatprep.mubr.f32.mxu0 0.0
    %111 = vmatmul.mubr.f32.gmra.mrb[0].mxu0 %v39
    %v112 = vpop.f32.mrb[0].mxu0
    %v113 = vadd.f32 %v32, %v112
    %v114 = vpop.f32.mrb[0].mxu0
    %115 = vdwg.mxu0
    %v116 = vmax.f32 %v108, 0.0
    %v117 = vmax.f32 %v113, 0.0
    %v118 = vld [vmem:[%s3] sm:$0xff]
    %v119 = vld [vmem:[%s3 + $0x8] sm:$0xff]
    %v120 = vld [vmem:[%s3 + $0x10] sm:$0xff]
    %v121 = vld [vmem:[%s3 + $0x18] sm:$0xff]
    %v122 = vld [vmem:[%s3 + $0x20] sm:$0xff]
    %v123 = vld [vmem:[%s3 + $0x28] sm:$0xff]
    %v124 = vld [vmem:[%s3 + $0x30] sm:$0xff]
    %v125 = vld [vmem:[%s3 + $0x38] sm:$0xff]
    %v126 = vld [vmem:[%s4] sm:$0x1]
    %v128 = vlaneseq
    %v129 = vshrl.u32 %v128, 7
    %v130 = vsub.s32 0, %v129
    %v131 = vrot.slane %v126, %v130
    %vm133 = vcmask 523264
    %v135 = vsel %vm133, %v116, 0
    %v138 = vsel %vm133, %v117, 0
    %140 = vmatprep.subr.mxu0 0.0
    %141 = vmatpush1.msra.mxu0 %v118
    %142 = vmatprep.subr.mxu0 0.0
    %143 = vmatpush1.msra.mxu0 %v119
    %144 = vmatprep.subr.mxu0 0.0
    %145 = vmatpush1.msra.mxu0 %v120
    %146 = vmatprep.subr.mxu0 0.0
    %147 = vmatpush1.msra.mxu0 %v121
    %148 = vmatprep.subr.mxu0 0.0
    %149 = vmatpush1.msra.mxu0 %v122
    %150 = vmatprep.subr.mxu0 0.0
    %151 = vmatpush1.msra.mxu0 %v123
    %152 = vmatprep.subr.mxu0 0.0
    %153 = vmatpush1.msra.mxu0 %v124
    %154 = vmatprep.subr.mxu0 0.0
    %155 = vmatpush1.msra.mxu0 %v125
    %156 = vmatprep.subr.mxu0 0.0
    %157 = vmatpush1.msra.mxu0 0.0
    %158 = vmatprep.subr.mxu0 0.0
    %159 = vmatpush1.msra.mxu0 0.0
    %160 = vmatprep.subr.mxu0 0.0
    %161 = vmatpush1.msra.mxu0 0.0
    %162 = vmatprep.subr.mxu0 0.0
    %163 = vmatpush1.msra.mxu0 0.0
    %164 = vmatprep.subr.mxu0 0.0
    %165 = vmatpush1.msra.mxu0 0.0
    %166 = vmatprep.subr.mxu0 0.0
    %167 = vmatpush1.msra.mxu0 0.0
    %168 = vmatprep.subr.mxu0 0.0
    %169 = vmatpush1.msra.mxu0 0.0
    %170 = vmatprep.subr.mxu0 0.0
    %171 = vmatpush1.msra.mxu0 0.0
    %172 = vmatprep.subr.mxu0 0.0
    %173 = vmatpush1.msra.mxu0 0.0
    %174 = vmatprep.subr.mxu0 0.0
    %175 = vmatpush1.msra.mxu0 0.0
    %176 = vmatprep.subr.mxu0 0.0
    %177 = vmatpush1.msra.mxu0 0.0
    %178 = vmatprep.subr.mxu0 0.0
    %179 = vmatpush1.msra.mxu0 0.0
    %180 = vmatprep.subr.mxu0 0.0
    %181 = vmatpush1.msra.mxu0 0.0
    %182 = vmatprep.subr.mxu0 0.0
    %183 = vmatpush1.msra.mxu0 0.0
    %184 = vmatprep.subr.mxu0 0.0
    %185 = vmatpush1.msra.mxu0 0.0
    %186 = vmatprep.subr.mxu0 0.0
    %187 = vmatpush1.msra.mxu0 0.0
    %188 = vmatprep.subr.mxu0 0.0
    %189 = vmatpush1.msra.mxu0 0.0
    %190 = vmatprep.subr.mxu0 0.0
    %191 = vmatpush1.msra.mxu0 0.0
    %192 = vmatprep.subr.mxu0 0.0
    %193 = vmatpush1.msra.mxu0 0.0
    %194 = vmatprep.subr.mxu0 0.0
    %195 = vmatpush1.msra.mxu0 0.0
    %196 = vmatprep.subr.mxu0 0.0
    %197 = vmatpush1.msra.mxu0 0.0
    %198 = vmatprep.subr.mxu0 0.0
    %199 = vmatpush1.msra.mxu0 0.0
    %200 = vmatprep.subr.mxu0 0.0
    %201 = vmatpush1.msra.mxu0 0.0
    %202 = vmatprep.subr.mxu0 0.0
    %203 = vmatpush1.msra.mxu0 0.0
    %204 = vmatprep.mubr.f32.mxu0 0.0
    %205 = vmatmul.mubr.f32.gmra.mrb[0].mxu0 %v135
    %v206 = vpop.f32.mrb[0].mxu0
    %v207 = vadd.f32 %v131, %v206
    %v208 = vpop.f32.mrb[0].mxu0
    %209 = vmatprep.mubr.f32.mxu0 0.0
    %210 = vmatmul.mubr.f32.gmra.mrb[0].mxu0 %v138
    %v211 = vpop.f32.mrb[0].mxu0
    %v212 = vadd.f32 %v131, %v211
    %v213 = vpop.f32.mrb[0].mxu0
    %214 = vdwg.mxu0
    %215 = vst.msk [vmem:[#allocation2] sm:$0xff] %vm34, %v207
    %216 = vst.msk [vmem:[#allocation2 + $0x8] sm:$0xff] %vm34, %v212
    // Predicated region
    $region22: #{tpu_custom_call.1} parent=1 // pred_check
      _
    $region23: #{tpu_custom_call.1} parent=1 // pred_check_branch
      %218 = sbr.rel (0) target = $region25
    $region24: #{tpu_custom_call.1} parent=1 // pred_region
      %s220 = ssub.s32 256, 256
      %221 = vsyncadd [#allocation3], %s220
      %s222 = sshll.u32 [#allocation2], 4
      %s223 = int_to_ptr.vmem [resolvable:$true] %s222
      %228 = dma.vmem_to_hbm [thread:$0]  %s223, 256, %s5, [#allocation3], 128, 128, 8
    $region25: #{tpu_custom_call.1} parent=1 // pred_fallthru
      _
    // Predicated region
    $region26: #{tpu_custom_call.1} parent=1 // pred_check
      _
    $region27: #{tpu_custom_call.1} parent=1 // pred_check_branch
      %230 = sbr.rel (0) target = $region29
    $region28: #{tpu_custom_call.1} parent=1 // pred_region
      %231 = dma.done [#allocation3], 256
    $region29: #{tpu_custom_call.1} parent=1 // pred_fallthru
      _
    %232 = vsyncpa [#allocation3], 1

</llo_original>
